<compile_context>
chip_gen: v7x
topology: tpu7x:2x2x1
jax: 0.10.0
libtpu: 0.0.40
codegen_flags: <defaults>
</compile_context>

<pallas_src>
import jax
import jax.numpy as jnp
from jax import lax
from jax.experimental import pallas as pl
from jax.experimental.pallas import tpu as pltpu

QMAX = 127.0          # 'INT', num_bits=8  ->  2**(8-1) - 1
RELU6_MAX = 6.0
LANES = 128           # TPU lane width
QWIDE = 512           # lane width of the elementwise quantization passes
QROWS_MAX = 1024      # max sublane rows per quantization-pass tile
SCALE_EPS = 1e-30     # guard against all-zero tensors (scale == 0)


def _round_up(a, m):
    return ((a + m - 1) // m) * m


# ---------------------------------------------------------------------------
# Pallas kernels
# ---------------------------------------------------------------------------

def _minmax_kernel(x_ref, mx_ref, mn_ref):
    """Fused per-tile max / min reduction (one read of x for the qi scale)."""
    v = x_ref[...]
    mx_ref[...] = jnp.broadcast_to(jnp.max(v, axis=0, keepdims=True), mx_ref.shape)
    mn_ref[...] = jnp.broadcast_to(jnp.min(v, axis=0, keepdims=True), mn_ref.shape)


def _quant_to_int_kernel(s_ref, x_ref, o_ref):
    """Integer-domain fake-quant: round(clip(x * (1/s), -127, 127)) as bf16.

    NOTE: multiply-by-reciprocal instead of true division; may differ from the
    reference by one quantization step exactly at a rounding boundary.
    """
    inv_s = 1.0 / s_ref[0]
    q = jnp.round(jnp.clip(x_ref[...] * inv_s, -QMAX, QMAX))
    o_ref[...] = q.astype(o_ref.dtype)           # integers <= 127: exact in bf16


def _fakequant_kernel(s_ref, x_ref, o_ref):
    """Output fake quantization: s * round(clip(x * (1/s), -127, 127))."""
    s = s_ref[0]
    inv_s = 1.0 / s
    xv = x_ref[...].astype(jnp.float32)
    o_ref[...] = s * jnp.round(jnp.clip(xv * inv_s, -QMAX, QMAX))


def _make_conv_kernel(kh, kw, th, ow, c, oc_pad):
    """Implicit-im2col conv + folded bias + ReLU6 + fused per-tile max."""
    m_rows = th * ow

    def kernel(sprod_ref, x_ref, w_ref, b_ref, y_ref, mx_ref):
        # x_ref : (H_pad, W_pad, C)  bf16 integer-domain activation, full padded
        #         image for this batch element (resident over the OH-tile axis).
        # w_ref : (KH*KW, C, OCp)    bf16 integer-domain folded weight.
        # b_ref : (1, OCp)           f32 folded bias.
        # y_ref : (TH*OW, OCp)       bf16 conv+bias+relu6 tile (lane dense).
        # mx_ref: (8, OCp)           f32 per-tile max (broadcast to 8 rows so
        #                            the store stays sublane aligned).
        oh0 = pl.program_id(1) * th
        acc = None
        for i in range(kh):
            for j in range(kw):
                a = x_ref[pl.ds(oh0 + i, th), pl.ds(j, ow), :]        # (TH,OW,C)
                a2 = a.reshape(m_rows, c)
                d = jnp.dot(a2, w_ref[i * kw + j],
                            preferred_element_type=jnp.float32)
                acc = d if acc is None else acc + d
        y = acc * sprod_ref[0] + b_ref[...]       # single scalar si*sw rescale
        y = jnp.clip(y, 0.0, RELU6_MAX)           # ReLU6
        y_ref[...] = y.astype(y_ref.dtype)
        # padded OC columns are exactly 0 after ReLU6 so they never win the
        # max; relu6 output >= 0, so the qo min-clamp contributes nothing.
        mx_ref[...] = jnp.broadcast_to(jnp.max(y, axis=0, keepdims=True),
                                       mx_ref.shape)

    return kernel


# ---------------------------------------------------------------------------
# pallas_call wrappers
# ---------------------------------------------------------------------------

def _to_2d(x):
    """Flatten x into a wide, lane-dense (rows, QWIDE) layout for the q-passes."""
    flat = x.reshape(-1)
    numel = flat.shape[0]
    rows = -(-numel // QWIDE)
    if rows <= QROWS_MAX:
        tr, rows_pad = rows, rows               # single full-extent block
    else:
        tr = QROWS_MAX
        rows_pad = _round_up(rows, tr)
    pad = rows_pad * QWIDE - numel
    if pad:
        flat = jnp.pad(flat, (0, pad))
    return flat.reshape(rows_pad, QWIDE), tr, numel


def _input_scale(x2d, tr):
    """qi scale from ONE fused min/max pass (padded zeros are absorbed by the
    min<=0 / max>=0 clamps of QParam.update)."""
    rows_pad, width = x2d.shape
    grid = rows_pad // tr
    mx, mn = pl.pallas_call(
        _minmax_kernel,
        out_shape=(jax.ShapeDtypeStruct((grid * 8, width), jnp.float32),
                   jax.ShapeDtypeStruct((grid * 8, width), jnp.float32)),
        grid=(grid,),
        in_specs=[pl.BlockSpec((tr, width), lambda i: (i, 0))],
        out_specs=(pl.BlockSpec((8, width), lambda i: (i, 0)),
                   pl.BlockSpec((8, width), lambda i: (i, 0))),
        compiler_params=pltpu.CompilerParams(
            dimension_semantics=("parallel",)),
    )(x2d)
    gmax = jnp.maximum(jnp.max(mx), 0.0)
    gmin = jnp.minimum(jnp.min(mn), 0.0)
    return jnp.maximum(jnp.maximum(gmax, -gmin) / QMAX, SCALE_EPS)


def _quantize_to_int_bf16(x2d, scale, tr, numel, out_shape):
    """One integer-domain fake-quant pass over the activation (bf16 out)."""
    rows_pad, width = x2d.shape
    grid = rows_pad // tr
    s = scale.reshape(1).astype(jnp.float32)
    q = pl.pallas_call(
        _quant_to_int_kernel,
        out_shape=jax.ShapeDtypeStruct((rows_pad, width), jnp.bfloat16),
        grid=(grid,),
        in_specs=[
            pl.BlockSpec(memory_space=pltpu.SMEM),                 # scale (1,)
            pl.BlockSpec((tr, width), lambda i: (i, 0)),
        ],
        out_specs=pl.BlockSpec((tr, width), lambda i: (i, 0)),
        compiler_params=pltpu.CompilerParams(
            dimension_semantics=("parallel",)),
    )(s, x2d)
    return q.reshape(-1)[:numel].reshape(out_shape)


def _qconv_relu6(sprod, xq_pad, wmat, bias2d, *, kh, kw, th, oh, ow, oc_pad):
    n, h_pad, w_pad, c = xq_pad.shape
    grid_oh = oh // th
    m_rows = th * ow
    m_total = n * oh * ow
    kernel = _make_conv_kernel(kh, kw, th, ow, c, oc_pad)
    y2d, tile_max = pl.pallas_call(
        kernel,
        out_shape=(
            jax.ShapeDtypeStruct((m_total, oc_pad), jnp.bfloat16),      # conv+relu6
            jax.ShapeDtypeStruct((n * grid_oh * 8, oc_pad), jnp.float32),  # tile max
        ),
        grid=(n, grid_oh),
        in_specs=[
            pl.BlockSpec(memory_space=pltpu.SMEM),                      # si*sw (1,)
            pl.BlockSpec((None, h_pad, w_pad, c),                       # activation
                         lambda b, t: (b, 0, 0, 0)),
            pl.BlockSpec((kh * kw, c, oc_pad), lambda b, t: (0, 0, 0)),  # weight
            pl.BlockSpec((1, oc_pad), lambda b, t: (0, 0)),              # bias
        ],
        out_specs=(
            pl.BlockSpec((m_rows, oc_pad), lambda b, t: (b * grid_oh + t, 0)),
            pl.BlockSpec((8, oc_pad), lambda b, t: (b * grid_oh + t, 0)),
        ),
        compiler_params=pltpu.CompilerParams(
            dimension_semantics=("parallel", "parallel")),
    )(sprod, xq_pad, wmat, bias2d)
    return y2d, tile_max


def _fakequant_2d(scale, y2d, tq):
    m_total, oc_pad = y2d.shape
    s = scale.reshape(1).astype(jnp.float32)
    return pl.pallas_call(
        _fakequant_kernel,
        out_shape=jax.ShapeDtypeStruct((m_total, oc_pad), jnp.float32),
        grid=(m_total // tq,),
        in_specs=[
            pl.BlockSpec(memory_space=pltpu.SMEM),
            pl.BlockSpec((tq, oc_pad), lambda i: (i, 0)),
        ],
        out_specs=pl.BlockSpec((tq, oc_pad), lambda i: (i, 0)),
        compiler_params=pltpu.CompilerParams(
            dimension_semantics=("parallel",)),
    )(s, y2d)


# ---------------------------------------------------------------------------
# module forward
# ---------------------------------------------------------------------------

def fold_bn(conv_weight, conv_bias, bn_gamma, bn_beta, mean, var, eps):
    """QConvBNReLU6.fold_bn with affine BN (eval-mode running stats)."""
    std = jnp.sqrt(var + eps)
    gamma_ = bn_gamma / std
    weight = conv_weight * gamma_.reshape(-1, 1, 1, 1)
    if conv_bias is not None:
        bias = gamma_ * conv_bias - gamma_ * mean + bn_beta
    else:
        bias = bn_beta - gamma_ * mean
    return weight, bias


def _pick_th(oh, ow, target_rows=128):
    """Largest OH-tile that divides OH, keeps TH*OW sublane aligned and <= target."""
    valid = [t for t in range(1, oh + 1)
             if oh % t == 0 and (t * ow) % 8 == 0]
    if not valid:
        raise NotImplementedError(
            f"TODO(synk): no sublane-aligned OH tiling for OH={oh}, OW={ow}")
    fitting = [t for t in valid if t * ow <= target_rows]
    return max(fitting) if fitting else min(valid)


def qconvbnrelu6_forward(x, conv_weight, conv_bias,
                         bn_gamma, bn_beta, running_mean, running_var,
                         eps=1e-5, stride=1, padding=1):
    """QConvBNReLU6.forward (eval mode). x: (N,C,H,W); conv_weight: (OC,C,KH,KW)."""
    if stride != 1:
        raise NotImplementedError("TODO(synk): only stride=1 is implemented")
    oc, c, kh, kw = conv_weight.shape
    n, c_in, h, w = x.shape
    assert c_in == c
    oh = h + 2 * padding - kh + 1
    ow = w + 2 * padding - kw + 1

    # --- qi: fused min/max pass -> scale_i; one integer-domain quantize ------
    x2d, tr, numel = _to_2d(x.astype(jnp.float32))
    scale_i = _input_scale(x2d, tr)
    xq = _quantize_to_int_bf16(x2d, scale_i, tr, numel, (n, c, h, w))

    # activation -> zero-padded NHWC for the implicit-im2col GEMM (relayout is
    # done by XLA on the half-width bf16 quantized tensor; see TODO at top).
    xq_pad = jnp.pad(jnp.transpose(xq, (0, 2, 3, 1)),
                     ((0, 0), (padding, padding), (padding, padding), (0, 0)))

    # --- fold BN; qw: weight scale + one-time integer-domain quant (tiny) ----
    w_fold, b_fold = fold_bn(conv_weight, conv_bias, bn_gamma, bn_beta,
                             running_mean, running_var, eps)
    wmax = jnp.maximum(jnp.max(w_fold), 0.0)
    wmin = jnp.minimum(jnp.min(w_fold), 0.0)
    scale_w = jnp.maximum(jnp.maximum(wmax, -wmin) / QMAX, SCALE_EPS)
    wq_int = jnp.round(jnp.clip(w_fold / scale_w, -QMAX, QMAX))

    # lane-dense weight layout: (KH*KW taps, C, OC padded to 128)
    oc_pad = _round_up(oc, LANES)
    w_taps = jnp.transpose(wq_int, (2, 3, 1, 0)).reshape(kh * kw, c, oc)
    wmat = jnp.zeros((kh * kw, c, oc_pad), jnp.bfloat16)
    wmat = wmat.at[:, :, :oc].set(w_taps.astype(jnp.bfloat16))
    bias2d = jnp.zeros((1, oc_pad), jnp.float32)
    bias2d = bias2d.at[0, :oc].set(b_fold.astype(jnp.float32))

    # --- implicit-im2col conv + si*sw rescale + bias + ReLU6 + fused max -----
    th = _pick_th(oh, ow)
    sprod = (scale_i * scale_w).reshape(1).astype(jnp.float32)
    y2d, tile_max = _qconv_relu6(sprod, xq_pad, wmat, bias2d,
                                 kh=kh, kw=kw, th=th, oh=oh, ow=ow,
                                 oc_pad=oc_pad)

    # --- qo: scale from the fused tile max; lane-dense output fake-quant -----
    scale_o = jnp.maximum(jnp.max(tile_max) / QMAX, SCALE_EPS)
    yq2d = _fakequant_2d(scale_o, y2d, tq=th * ow)

    # back to NCHW (module interface); see TODO at top about the relayout.
    y = yq2d[:, :oc].reshape(n, oh, ow, oc).transpose(0, 3, 1, 2)
    return y


# ---------------------------------------------------------------------------
# pure-JAX reference (mirrors the PyTorch module semantics)
# ---------------------------------------------------------------------------

def _calc_scale_ref(t):
    mx = jnp.maximum(jnp.max(t), 0.0)
    mn = jnp.minimum(jnp.min(t), 0.0)
    return jnp.maximum(jnp.maximum(jnp.abs(mx), jnp.abs(mn)) / QMAX, SCALE_EPS)


def _fq_ref(t, s):
    return s * jnp.round(jnp.clip(t / s, -QMAX, QMAX))


def qconvbnrelu6_forward_ref(x, conv_weight, conv_bias, bn_gamma, bn_beta,
                             running_mean, running_var, eps=1e-5,
                             stride=1, padding=1):
    si = _calc_scale_ref(x)
    xq = _fq_ref(x, si)
    w_fold, b_fold = fold_bn(conv_weight, conv_bias, bn_gamma, bn_beta,
                             running_mean, running_var, eps)
    sw = _calc_scale_ref(w_fold)
    wq = _fq_ref(w_fold, sw)
    y = lax.conv_general_dilated(
        xq, wq, window_strides=(stride, stride),
        padding=[(padding, padding), (padding, padding)],
        dimension_numbers=("NCHW", "OIHW", "NCHW"),
        precision=lax.Precision.HIGHEST,
    ) + b_fold.reshape(1, -1, 1, 1)
    y = jnp.clip(y, 0.0, RELU6_MAX)
    so = _calc_scale_ref(y)
    return _fq_ref(y, so)


# ---------------------------------------------------------------------------
# main
# ---------------------------------------------------------------------------

if __name__ == "__main__":
    key = jax.random.PRNGKey(0)
    kx, kw_, kb, kg, kbe, km, kv = jax.random.split(key, 7)

    # Conv2d(4, 8, kernel_size=3, stride=1, padding=1, bias=True) + BatchNorm2d(8)
    N, C, H, W = 2, 4, 16, 16
    OC, KH, KW = 8, 3, 3
    EPS = 1e-5

    x = jax.random.normal(kx, (N, C, H, W), dtype=jnp.float32)
    conv_w = 0.1 * jax.random.normal(kw_, (OC, C, KH, KW), dtype=jnp.float32)
    conv_b = 0.1 * jax.random.normal(kb, (OC,), dtype=jnp.float32)
    bn_gamma = 1.0 + 0.1 * jax.random.normal(kg, (OC,), dtype=jnp.float32)
    bn_beta = 0.1 * jax.random.normal(kbe, (OC,), dtype=jnp.float32)
    running_mean = 0.1 * jax.random.normal(km, (OC,), dtype=jnp.float32)
    running_var = jnp.abs(1.0 + 0.1 * jax.random.normal(kv, (OC,), dtype=jnp.float32))

    y = qconvbnrelu6_forward(x, conv_w, conv_b, bn_gamma, bn_beta,
                             running_mean, running_var, eps=EPS,
                             stride=1, padding=1)
    y = jax.block_until_ready(y)

    y_ref = qconvbnrelu6_forward_ref(x, conv_w, conv_b, bn_gamma, bn_beta,
                                     running_mean, running_var, eps=EPS,
                                     stride=1, padding=1)
    assert y.shape == (N, OC, H, W)
    # The integer-domain matmul is exact; the bf16 intermediate storage and the
    # reciprocal-vs-division rounding can move a value across at most one
    # output-quantization boundary, so allow one output step of disagreement.
    step = float(_calc_scale_ref(y_ref))
    max_err = float(jnp.max(jnp.abs(y - y_ref)))
    assert max_err <= step + 1e-3, max_err

    print("KERNEL_OK")
</pallas_src>

<mosaic_0001>
module attributes {stable_mosaic.version = 11 : i64} {
  func.func @_minmax_kernel(%arg0: i32, %arg1: memref<4x512xf32, #tpu.memory_space<vmem>>, %arg2: memref<8x512xf32, #tpu.memory_space<vmem>>, %arg3: memref<8x512xf32, #tpu.memory_space<vmem>>) attributes {dimension_semantics = [#tpu.dimension_semantics<parallel>], iteration_bounds = array<i64: 1>, scalar_prefetch = 0 : i64, scratch_operands = 0 : i64, tpu.core_type = #tpu.core_type<tc>, window_params = [{transform_indices = @transform_0, window_bounds = array<i64: 4, 512>}, {transform_indices = @transform_1, window_bounds = array<i64: 8, 512>}, {transform_indices = @transform_2, window_bounds = array<i64: 8, 512>}]} {
    %c0 = arith.constant 0 : index
    %c0_0 = arith.constant 0 : index
    %0 = vector.load %arg1[%c0, %c0_0] : memref<4x512xf32, #tpu.memory_space<vmem>>, vector<4x512xf32>
    %cst = arith.constant dense<0xFF800000> : vector<512xf32>
    %1 = vector.multi_reduction <maximumf>, %0, %cst [0] : vector<4x512xf32> to vector<512xf32>
    %2 = vector.shape_cast %1 : vector<512xf32> to vector<1x512xf32>
    %3 = vector.shape_cast %2 : vector<1x512xf32> to vector<1x512xf32>
    %4 = vector.broadcast %3 : vector<1x512xf32> to vector<8x512xf32>
    %c0_1 = arith.constant 0 : index
    %c0_2 = arith.constant 0 : index
    %5 = vector.load %arg2[%c0_1, %c0_2] : memref<8x512xf32, #tpu.memory_space<vmem>>, vector<8x512xf32>
    tpu.vector_store %arg2[%c0_1, %c0_2], %4 {strides = array<i32>} : memref<8x512xf32, #tpu.memory_space<vmem>>, vector<8x512xf32>,
    %cst_3 = arith.constant dense<0x7F800000> : vector<512xf32>
    %6 = vector.multi_reduction <minimumf>, %0, %cst_3 [0] : vector<4x512xf32> to vector<512xf32>
    %7 = vector.shape_cast %6 : vector<512xf32> to vector<1x512xf32>
    %8 = vector.shape_cast %7 : vector<1x512xf32> to vector<1x512xf32>
    %9 = vector.broadcast %8 : vector<1x512xf32> to vector<8x512xf32>
    %c0_4 = arith.constant 0 : index
    %c0_5 = arith.constant 0 : index
    %10 = vector.load %arg3[%c0_4, %c0_5] : memref<8x512xf32, #tpu.memory_space<vmem>>, vector<8x512xf32>
    tpu.vector_store %arg3[%c0_4, %c0_5], %9 {strides = array<i32>} : memref<8x512xf32, #tpu.memory_space<vmem>>, vector<8x512xf32>,
    return
  }
  func.func @transform_0(%arg0: i32) -> (i32, i32) {
    %c0_i32 = arith.constant 0 : i32
    %c0_i32_0 = arith.constant 0 : i32
    return %arg0, %c0_i32 : i32, i32
  }
  func.func @transform_1(%arg0: i32) -> (i32, i32) {
    %c0_i32 = arith.constant 0 : i32
    %c0_i32_0 = arith.constant 0 : i32
    return %arg0, %c0_i32 : i32, i32
  }
  func.func @transform_2(%arg0: i32) -> (i32, i32) {
    %c0_i32 = arith.constant 0 : i32
    %c0_i32_0 = arith.constant 0 : i32
    return %arg0, %c0_i32 : i32, i32
  }
}

</mosaic_0001>

<llo_original>
// kernel: tpu_custom_call.1
$region0: #{tpu_custom_call.1}
  #allocation0 [shape = 'u32[]', space=smem, size = 0x4, offset = 0x4, fixed_abs, tag = 'smem constant byte address 0x4 - core index']
  #allocation1 [shape = 'u32[144,128]{1,0:T(1,128)}', space=vmem, size = 0x12000, scoped, tag = 'internal scratch']
  %s0 = inlined_call_operand.hbm [shape: f32[4,512], index: 0, kind: input, shape index: {}]
  %s1 = inlined_call_operand.hbm [shape: f32[8,512], index: 1, kind: output, shape index: {0}]
  %s2 = inlined_call_operand.hbm [shape: f32[8,512], index: 2, kind: output, shape index: {1}]
  %3 = xla_tuple %s1, %s2
  %s4 = sld [smem:[#allocation0]]
  $region26: #{tpu_custom_call.1} parent=0
    _
  %s6 = ssub.s32 1, %s4
  %s7 = scalar_select 0, %s6, %s4
  $region1: #{tpu_custom_call.1} parent=0
    #allocation2 [shape = 'u8[8192]{0}', space=vmem, size = 0x2000, scoped, tag = 'input window, operand 0, single buffered']
    #allocation3 [shape = 's32[1]{0}', space=sflag, size = 0x4, scoped, tag = 'scoped memory for tpu_custom_call.1']
    #allocation4 [shape = 's32[1]{0}', space=sflag, size = 0x4, scoped, tag = 'scoped memory for tpu_custom_call.1']
    #allocation5 [shape = 'u8[16384]{0}', space=vmem, size = 0x4000, scoped, tag = 'output window, operand 0, single buffered']
    #allocation6 [shape = 'u8[16384]{0}', space=vmem, size = 0x4000, scoped, tag = 'output window, operand 1, single buffered']
    #allocation7 [shape = 's32[1]{0}', space=sflag, size = 0x4, scoped, tag = 'scoped memory for tpu_custom_call.1']
    %8 = vsyncpa [#allocation3], 0
    %9 = vsyncpa [#allocation4], 0
    %10 = vsyncpa [#allocation7], 0
    // Predicated region
    $region2: #{tpu_custom_call.1} parent=1 // pred_check
      _
    $region3: #{tpu_custom_call.1} parent=1 // pred_check_branch
      %12 = sbr.rel (0) target = $region5
    $region4: #{tpu_custom_call.1} parent=1 // pred_region
      %s14 = ssub.s32 256, 256
      %15 = vsyncadd [#allocation3], %s14
      %s17 = sshll.u32 [#allocation2], 4
      %s18 = int_to_ptr.vmem [resolvable:$true] %s17
      %20 = dma.hbm_to_vmem [thread:$0]  %s0, 256, %s18, [#allocation3]
    $region5: #{tpu_custom_call.1} parent=1 // pred_fallthru
      _
    // Predicated region
    $region6: #{tpu_custom_call.1} parent=1 // pred_check
      _
    $region7: #{tpu_custom_call.1} parent=1 // pred_check_branch
      %22 = sbr.rel (0) target = $region9
    $region8: #{tpu_custom_call.1} parent=1 // pred_region
      %23 = dma.done [#allocation3], 256
    $region9: #{tpu_custom_call.1} parent=1 // pred_fallthru
      _
    %v24 = vld [vmem:[#allocation2] sm:$0xff]
    %v25 = vld [vmem:[#allocation2 + $0x8] sm:$0xff]
    %v28 = vcombine.high %v24, %v24
    %v29 = vcombine.high %v25, %v25
    %vm32 = vcmask 1043456
    %v33 = vsel %vm32, %v24, -inf
    %v34 = vrot.slane %v33, 4
    %v35 = vmax.f32 %v33, %v34
    %v36 = vrot.slane %v35, 2
    %v37 = vmax.f32 %v35, %v36
    %v38 = vrot.slane %v37, 1
    %v39 = vmax.f32 %v37, %v38
    %v40 = vsel %vm32, %v28, -inf
    %v41 = vrot.slane %v40, 4
    %v42 = vmax.f32 %v40, %v41
    %v43 = vrot.slane %v42, 2
    %v44 = vmax.f32 %v42, %v43
    %v45 = vrot.slane %v44, 1
    %v46 = vmax.f32 %v44, %v45
    %v47 = vsel %vm32, %v25, -inf
    %v48 = vrot.slane %v47, 4
    %v49 = vmax.f32 %v47, %v48
    %v50 = vrot.slane %v49, 2
    %v51 = vmax.f32 %v49, %v50
    %v52 = vrot.slane %v51, 1
    %v53 = vmax.f32 %v51, %v52
    %v54 = vsel %vm32, %v29, -inf
    %v55 = vrot.slane %v54, 4
    %v56 = vmax.f32 %v54, %v55
    %v57 = vrot.slane %v56, 2
    %v58 = vmax.f32 %v56, %v57
    %v59 = vrot.slane %v58, 1
    %v60 = vmax.f32 %v58, %v59
    %61 = vst [vmem:[#allocation5] sm:$0xff] %v39
    %62 = vst [vmem:[#allocation5 + $0x8] sm:$0xff] %v46
    %63 = vst [vmem:[#allocation5 + $0x10] sm:$0xff] %v53
    %64 = vst [vmem:[#allocation5 + $0x18] sm:$0xff] %v60
    %v65 = vsel %vm32, %v24, inf
    %v66 = vrot.slane %v65, 4
    %v67 = vmin.f32 %v65, %v66
    %v68 = vrot.slane %v67, 2
    %v69 = vmin.f32 %v67, %v68
    %v70 = vrot.slane %v69, 1
    %v71 = vmin.f32 %v69, %v70
    %v72 = vsel %vm32, %v28, inf
    %v73 = vrot.slane %v72, 4
    %v74 = vmin.f32 %v72, %v73
    %v75 = vrot.slane %v74, 2
    %v76 = vmin.f32 %v74, %v75
    %v77 = vrot.slane %v76, 1
    %v78 = vmin.f32 %v76, %v77
    %v79 = vsel %vm32, %v25, inf
    %v80 = vrot.slane %v79, 4
    %v81 = vmin.f32 %v79, %v80
    %v82 = vrot.slane %v81, 2
    %v83 = vmin.f32 %v81, %v82
    %v84 = vrot.slane %v83, 1
    %v85 = vmin.f32 %v83, %v84
    %v86 = vsel %vm32, %v29, inf
    %v87 = vrot.slane %v86, 4
    %v88 = vmin.f32 %v86, %v87
    %v89 = vrot.slane %v88, 2
    %v90 = vmin.f32 %v88, %v89
    %v91 = vrot.slane %v90, 1
    %v92 = vmin.f32 %v90, %v91
    %93 = vst [vmem:[#allocation6] sm:$0xff] %v71
    %94 = vst [vmem:[#allocation6 + $0x8] sm:$0xff] %v78
    %95 = vst [vmem:[#allocation6 + $0x10] sm:$0xff] %v85
    %96 = vst [vmem:[#allocation6 + $0x18] sm:$0xff] %v92
    // Predicated region
    $region10: #{tpu_custom_call.1} parent=1 // pred_check
      _
    $region11: #{tpu_custom_call.1} parent=1 // pred_check_branch
      %98 = sbr.rel (0) target = $region13
    $region12: #{tpu_custom_call.1} parent=1 // pred_region
      %s100 = ssub.s32 512, 512
      %101 = vsyncadd [#allocation4], %s100
      %s103 = sshll.u32 [#allocation5], 4
      %s104 = int_to_ptr.vmem [resolvable:$true] %s103
      %106 = dma.vmem_to_hbm [thread:$0]  %s104, 512, %s1, [#allocation4]
    $region13: #{tpu_custom_call.1} parent=1 // pred_fallthru
      _
    // Predicated region
    $region14: #{tpu_custom_call.1} parent=1 // pred_check
      _
    $region15: #{tpu_custom_call.1} parent=1 // pred_check_branch
      %108 = sbr.rel (0) target = $region17
    $region16: #{tpu_custom_call.1} parent=1 // pred_region
      %s110 = ssub.s32 512, 512
      %111 = vsyncadd [#allocation7], %s110
      %s113 = sshll.u32 [#allocation6], 4
      %s114 = int_to_ptr.vmem [resolvable:$true] %s113
      %116 = dma.vmem_to_hbm [thread:$0]  %s114, 512, %s2, [#allocation7]
    $region17: #{tpu_custom_call.1} parent=1 // pred_fallthru
      _
    // Predicated region
    $region18: #{tpu_custom_call.1} parent=1 // pred_check
      _
    $region19: #{tpu_custom_call.1} parent=1 // pred_check_branch
      %118 = sbr.rel (0) target = $region21
    $region20: #{tpu_custom_call.1} parent=1 // pred_region
      %119 = dma.done [#allocation4], 512
    $region21: #{tpu_custom_call.1} parent=1 // pred_fallthru
      _
    // Predicated region
    $region22: #{tpu_custom_call.1} parent=1 // pred_check
      _
    $region23: #{tpu_custom_call.1} parent=1 // pred_check_branch
      %121 = sbr.rel (0) target = $region25
    $region24: #{tpu_custom_call.1} parent=1 // pred_region
      %122 = dma.done [#allocation7], 512
    $region25: #{tpu_custom_call.1} parent=1 // pred_fallthru
      _
    %123 = vsyncpa [#allocation3], 1
    %124 = vsyncpa [#allocation4], 1
    %125 = vsyncpa [#allocation7], 1

</llo_original>
